<compile_context>
chip_gen: v6e
topology: v6e:2x2x1
jax: 0.10.0
libtpu: 0.0.40
codegen_flags: <defaults>
</compile_context>

<pallas_src>
import jax
import jax.numpy as jnp
from jax.experimental import pallas as pl
from jax.experimental.pallas import tpu as pltpu


def _tree_sum(terms):
    """Pairwise (log-depth) sum of a list of arrays — gives the VALU slots ILP."""
    assert terms
    while len(terms) > 1:
        nxt = [terms[i] + terms[i + 1] for i in range(0, len(terms) - 1, 2)]
        if len(terms) % 2:
            nxt.append(terms[-1])
        terms = nxt
    return terms[0]


def _make_kernel(E, tile_rows, rows_valid, inv_e, inv_e2, inv_hw, need_mask):
    def kernel(fore_ref, obs_ref, out_ref, acc_ref):
        s = pl.program_id(1)
        n_s = pl.num_programs(1)

        o = obs_ref[0].astype(jnp.float32)           # (tile_rows, 128)
        f = fore_ref[0].astype(jnp.float32)          # (E, tile_rows, 128)
        fs = [f[e] for e in range(E)]                # free leading-dim slices

        # term1[p] = sum_e |f_e[p] - o[p]|  — dense VPU, no sublane reduce.
        contrib = _tree_sum([jnp.abs(fe - o) for fe in fs]) * inv_e

        # 0.5 * mean_{e1,e2}|f_e1 - f_e2| = (sum_{e1<e2} |.|) / E^2  (diag = 0).
        if E >= 2:
            pair = _tree_sum([jnp.abs(fs[e1] - fs[e2])
                              for e1 in range(E)
                              for e2 in range(e1 + 1, E)])
            contrib = contrib - pair * inv_e2

        if need_mask:
            # Ragged last row-tile: rows >= rows_valid are OOB garbage -> zero
            # the combined contribution (both terms) there.
            row_ids = s * tile_rows + jax.lax.broadcasted_iota(
                jnp.int32, (tile_rows, 128), 0)
            contrib = jnp.where(row_ids < rows_valid, contrib, 0.0)

        @pl.when(s == 0)
        def _init():
            acc_ref[...] = jnp.zeros_like(acc_ref)

        acc_ref[...] = acc_ref[...] + contrib

        @pl.when(s == n_s - 1)
        def _finalize():
            # Single cross-lane reduce per sample; 128-lane zero padding of the
            # last valid row contributes 0 (fore and obs padded identically).
            per_sample = jnp.sum(acc_ref[...]) * inv_hw
            out_ref[...] = jnp.broadcast_to(
                per_sample, out_ref.shape).astype(out_ref.dtype)

    return kernel


def crps_loss_batch_mean_first(fore, obs, *, input_tile_budget_bytes=8 * 1024 * 1024):
    """fore: (B, E, H, W), obs: (B, H, W) -> scalar f32 CRPS loss."""
    B, E, H, W = fore.shape
    assert obs.shape == (B, H, W)
    N = H * W
    R = -(-N // 128)                 # number of 128-wide spatial rows
    N128 = R * 128

    fore_flat = fore.reshape(B, E, N)
    obs_flat = obs.reshape(B, N)
    if N128 != N:
        # Minimal zero pad to the 128-lane boundary only (|0-0| contributes 0).
        # TODO(synk): avoid even this copy with a flat-layout in-kernel tail mask.
        fore_flat = jnp.pad(fore_flat, ((0, 0), (0, 0), (0, N128 - N)))
        obs_flat = jnp.pad(obs_flat, ((0, 0), (0, N128 - N)))

    # Free reshapes: E stays on a leading (untiled) axis; spatial owns the
    # (sublane, lane) = (R, 128) minor dims -> dense vregs, no E sublane pad.
    fore_r = fore_flat.reshape(B, E, R, 128)
    obs_r = obs_flat.reshape(B, R, 128)

    # Tile sizing: ~input_tile_budget_bytes of input per grid step (Pallas
    # double-buffers), E-aware so large ensembles still fit v7x's 64 MiB VMEM.
    itemsize = jnp.dtype(fore.dtype).itemsize
    row_bytes = (E + 1) * 128 * itemsize            # fore (E rows) + obs per spatial row
    max_rows = max(8, (input_tile_budget_bytes // row_bytes) // 8 * 8)
    if R <= max_rows:
        tile_rows, num_tiles = R, 1                 # full dim: always layout-legal
    else:
        tile_rows = max_rows                        # multiple of 8
        num_tiles = -(-R // tile_rows)
    need_mask = (num_tiles * tile_rows) != R

    inv_e = 1.0 / float(E)
    inv_e2 = 1.0 / float(E * E)
    inv_hw = 1.0 / float(N)                         # true H*W, not padded

    kernel = _make_kernel(E, tile_rows, R, inv_e, inv_e2, inv_hw, need_mask)

    n_pair = (E * (E - 1)) // 2
    flops = B * R * 128 * (3 * E + 3 * n_pair + 3)
    bytes_accessed = B * (E + 1) * R * 128 * itemsize + B * 128 * 4

    out = pl.pallas_call(
        kernel,
        out_shape=jax.ShapeDtypeStruct((B, 1, 128), jnp.float32),
        grid_spec=pltpu.PrefetchScalarGridSpec(
            num_scalar_prefetch=0,
            grid=(B, num_tiles),                    # spatial reduction axis last
            in_specs=[
                pl.BlockSpec((1, E, tile_rows, 128), lambda b, s: (b, 0, s, 0)),
                pl.BlockSpec((1, tile_rows, 128), lambda b, s: (b, s, 0)),
            ],
            out_specs=pl.BlockSpec((1, 1, 128), lambda b, s: (b, 0, 0)),
            scratch_shapes=[pltpu.VMEM((tile_rows, 128), jnp.float32)],
        ),
        compiler_params=pltpu.CompilerParams(
            dimension_semantics=("parallel", "arbitrary"),
            vmem_limit_bytes=40 * 1024 * 1024,      # > v5e 16 MiB default, < v7x ~48 MiB cap
        ),
        cost_estimate=pl.CostEstimate(
            flops=flops, transcendentals=0, bytes_accessed=bytes_accessed),
    )(fore_r, obs_r)

    per_sample = out[:, 0, 0]                       # (B,)
    return jnp.sum(per_sample) / B


def crps_ref(fore, obs):
    """Pure-JAX reference mirroring the PyTorch module exactly."""
    f = jnp.transpose(fore, (0, 2, 3, 1))                            # (B, H, W, E)
    term1 = jnp.mean(jnp.abs(f - obs[..., None]), axis=-1)           # (B, H, W)
    fdiff = f[..., :, None] - f[..., None, :]                        # (B, H, W, E, E)
    term2 = jnp.mean(jnp.abs(fdiff), axis=(-2, -1))                  # (B, H, W)
    per_sample = jnp.mean(term1 - 0.5 * term2, axis=(1, 2))          # (B,)
    return jnp.sum(per_sample) / fore.shape[0]


if __name__ == "__main__":
    key = jax.random.PRNGKey(0)
    k1, k2 = jax.random.split(key)

    B, E, H, W = 2, 4, 16, 16
    fore = jax.random.normal(k1, (B, E, H, W), dtype=jnp.float32)
    obs = jax.random.normal(k2, (B, H, W), dtype=jnp.float32)

    result = crps_loss_batch_mean_first(fore, obs)
    result = jax.block_until_ready(result)

    expected = jax.block_until_ready(crps_ref(fore, obs))
    assert jnp.allclose(result, expected, rtol=1e-5, atol=1e-5), (result, expected)

    print("KERNEL_OK")
</pallas_src>

<mosaic_0001>
module attributes {stable_mosaic.version = 11 : i64} {
  func.func @kernel(%arg0: i32, %arg1: i32, %arg2: memref<1x4x2x128xf32, #tpu.memory_space<vmem>>, %arg3: memref<1x2x128xf32, #tpu.memory_space<vmem>>, %arg4: memref<1x1x128xf32, #tpu.memory_space<vmem>>, %arg5: memref<2x128xf32, #tpu.memory_space<vmem>>) attributes {dimension_semantics = [#tpu.dimension_semantics<parallel>, #tpu.dimension_semantics<arbitrary>], iteration_bounds = array<i64: 2, 1>, scalar_prefetch = 0 : i64, scratch_operands = 1 : i64, tpu.core_type = #tpu.core_type<tc>, window_params = [{transform_indices = @transform_0, window_bounds = array<i64: 1, 4, 2, 128>}, {transform_indices = @transform_1, window_bounds = array<i64: 1, 2, 128>}, {transform_indices = @transform_2, window_bounds = array<i64: 1, 1, 128>}]} {
    %c0 = arith.constant 0 : index
    %c0_0 = arith.constant 0 : index
    %c0_1 = arith.constant 0 : index
    %0 = vector.load %arg3[%c0, %c0_0, %c0_1] : memref<1x2x128xf32, #tpu.memory_space<vmem>>, vector<1x2x128xf32>
    %1 = vector.shape_cast %0 : vector<1x2x128xf32> to vector<2x128xf32>
    %c0_2 = arith.constant 0 : index
    %c0_3 = arith.constant 0 : index
    %c0_4 = arith.constant 0 : index
    %c0_5 = arith.constant 0 : index
    %2 = vector.load %arg2[%c0_2, %c0_3, %c0_4, %c0_5] : memref<1x4x2x128xf32, #tpu.memory_space<vmem>>, vector<1x4x2x128xf32>
    %3 = vector.shape_cast %2 : vector<1x4x2x128xf32> to vector<4x2x128xf32>
    %4 = vector.extract_strided_slice %3 {offsets = [0, 0, 0], sizes = [1, 2, 128], strides = [1, 1, 1]} : vector<4x2x128xf32> to vector<1x2x128xf32>
    %5 = vector.shape_cast %4 : vector<1x2x128xf32> to vector<2x128xf32>
    %6 = vector.extract_strided_slice %3 {offsets = [1, 0, 0], sizes = [1, 2, 128], strides = [1, 1, 1]} : vector<4x2x128xf32> to vector<1x2x128xf32>
    %7 = vector.shape_cast %6 : vector<1x2x128xf32> to vector<2x128xf32>
    %8 = vector.extract_strided_slice %3 {offsets = [2, 0, 0], sizes = [1, 2, 128], strides = [1, 1, 1]} : vector<4x2x128xf32> to vector<1x2x128xf32>
    %9 = vector.shape_cast %8 : vector<1x2x128xf32> to vector<2x128xf32>
    %10 = vector.extract_strided_slice %3 {offsets = [3, 0, 0], sizes = [1, 2, 128], strides = [1, 1, 1]} : vector<4x2x128xf32> to vector<1x2x128xf32>
    %11 = vector.shape_cast %10 : vector<1x2x128xf32> to vector<2x128xf32>
    %12 = arith.subf %5, %1 : vector<2x128xf32>
    %13 = math.absf %12 : vector<2x128xf32>
    %14 = arith.subf %7, %1 : vector<2x128xf32>
    %15 = math.absf %14 : vector<2x128xf32>
    %16 = arith.subf %9, %1 : vector<2x128xf32>
    %17 = math.absf %16 : vector<2x128xf32>
    %18 = arith.subf %11, %1 : vector<2x128xf32>
    %19 = math.absf %18 : vector<2x128xf32>
    %20 = arith.addf %13, %15 : vector<2x128xf32>
    %21 = arith.addf %17, %19 : vector<2x128xf32>
    %22 = arith.addf %20, %21 : vector<2x128xf32>
    %cst = arith.constant 2.500000e-01 : f32
    %23 = vector.broadcast %cst : f32 to vector<2x128xf32>
    %24 = arith.mulf %22, %23 : vector<2x128xf32>
    %25 = arith.subf %5, %7 : vector<2x128xf32>
    %26 = math.absf %25 : vector<2x128xf32>
    %27 = arith.subf %5, %9 : vector<2x128xf32>
    %28 = math.absf %27 : vector<2x128xf32>
    %29 = arith.subf %5, %11 : vector<2x128xf32>
    %30 = math.absf %29 : vector<2x128xf32>
    %31 = arith.subf %7, %9 : vector<2x128xf32>
    %32 = math.absf %31 : vector<2x128xf32>
    %33 = arith.subf %7, %11 : vector<2x128xf32>
    %34 = math.absf %33 : vector<2x128xf32>
    %35 = arith.subf %9, %11 : vector<2x128xf32>
    %36 = math.absf %35 : vector<2x128xf32>
    %37 = arith.addf %26, %28 : vector<2x128xf32>
    %38 = arith.addf %30, %32 : vector<2x128xf32>
    %39 = arith.addf %34, %36 : vector<2x128xf32>
    %40 = arith.addf %37, %38 : vector<2x128xf32>
    %41 = arith.addf %40, %39 : vector<2x128xf32>
    %cst_6 = arith.constant 6.250000e-02 : f32
    %42 = vector.broadcast %cst_6 : f32 to vector<2x128xf32>
    %43 = arith.mulf %41, %42 : vector<2x128xf32>
    %44 = arith.subf %24, %43 : vector<2x128xf32>
    %c0_i32 = arith.constant 0 : i32
    %45 = arith.cmpi eq, %arg1, %c0_i32 : i32
    %46 = arith.extui %45 : i1 to i32
    %c0_i32_7 = arith.constant 0 : i32
    %47 = arith.cmpi ne, %46, %c0_i32_7 : i32
    scf.if %47 {
      %cst_14 = arith.constant 0.000000e+00 : f32
      %54 = vector.broadcast %cst_14 : f32 to vector<2x128xf32>
      %c0_15 = arith.constant 0 : index
      %c0_16 = arith.constant 0 : index
      %55 = vector.load %arg5[%c0_15, %c0_16] : memref<2x128xf32, #tpu.memory_space<vmem>>, vector<2x128xf32>
      tpu.vector_store %arg5[%c0_15, %c0_16], %54 {strides = array<i32>} : memref<2x128xf32, #tpu.memory_space<vmem>>, vector<2x128xf32>,
    } else {
    }
    %c0_8 = arith.constant 0 : index
    %c0_9 = arith.constant 0 : index
    %48 = vector.load %arg5[%c0_8, %c0_9] : memref<2x128xf32, #tpu.memory_space<vmem>>, vector<2x128xf32>
    %49 = arith.addf %48, %44 : vector<2x128xf32>
    %c0_10 = arith.constant 0 : index
    %c0_11 = arith.constant 0 : index
    %50 = vector.load %arg5[%c0_10, %c0_11] : memref<2x128xf32, #tpu.memory_space<vmem>>, vector<2x128xf32>
    tpu.vector_store %arg5[%c0_10, %c0_11], %49 {strides = array<i32>} : memref<2x128xf32, #tpu.memory_space<vmem>>, vector<2x128xf32>,
    %c0_i32_12 = arith.constant 0 : i32
    %51 = arith.cmpi eq, %arg1, %c0_i32_12 : i32
    %52 = arith.extui %51 : i1 to i32
    %c0_i32_13 = arith.constant 0 : i32
    %53 = arith.cmpi ne, %52, %c0_i32_13 : i32
    scf.if %53 {
      %c0_14 = arith.constant 0 : index
      %c0_15 = arith.constant 0 : index
      %54 = vector.load %arg5[%c0_14, %c0_15] : memref<2x128xf32, #tpu.memory_space<vmem>>, vector<2x128xf32>
      %55 = vector.shape_cast %54 : vector<2x128xf32> to vector<1x2x128xf32>
      %cst_16 = arith.constant dense<0.000000e+00> : vector<1xf32>
      %56 = vector.multi_reduction <add>, %55, %cst_16 [1, 2] : vector<1x2x128xf32> to vector<1xf32>
      %57 = vector.shape_cast %56 : vector<1xf32> to vector<1x1x1xf32>
      %58 = vector.extract %57[0, 0, 0] : f32 from vector<1x1x1xf32>
      %cst_17 = arith.constant 3.906250e-03 : f32
      %59 = arith.mulf %58, %cst_17 : f32
      %60 = vector.broadcast %59 : f32 to vector<1x1x128xf32>
      %c0_18 = arith.constant 0 : index
      %c0_19 = arith.constant 0 : index
      %c0_20 = arith.constant 0 : index
      %61 = vector.load %arg4[%c0_18, %c0_19, %c0_20] : memref<1x1x128xf32, #tpu.memory_space<vmem>>, vector<1x1x128xf32>
      tpu.vector_store %arg4[%c0_18, %c0_19, %c0_20], %60 {strides = array<i32>} : memref<1x1x128xf32, #tpu.memory_space<vmem>>, vector<1x1x128xf32>,
    } else {
    }
    return
  }
  func.func @transform_0(%arg0: i32, %arg1: i32) -> (i32, i32, i32, i32) {
    %c0_i32 = arith.constant 0 : i32
    %c0_i32_0 = arith.constant 0 : i32
    %c0_i32_1 = arith.constant 0 : i32
    return %arg0, %c0_i32, %arg1, %c0_i32_0 : i32, i32, i32, i32
  }
  func.func @transform_1(%arg0: i32, %arg1: i32) -> (i32, i32, i32) {
    %c0_i32 = arith.constant 0 : i32
    %c0_i32_0 = arith.constant 0 : i32
    return %arg0, %arg1, %c0_i32 : i32, i32, i32
  }
  func.func @transform_2(%arg0: i32, %arg1: i32) -> (i32, i32, i32) {
    %c0_i32 = arith.constant 0 : i32
    %c0_i32_0 = arith.constant 0 : i32
    %c0_i32_1 = arith.constant 0 : i32
    return %arg0, %c0_i32, %c0_i32_0 : i32, i32, i32
  }
}

</mosaic_0001>

<llo_original>
// kernel: tpu_custom_call.1
$region0: #{tpu_custom_call.1}
  #allocation0 [shape = 'u32[]', space=smem, size = 0x4, offset = 0x4, fixed_abs, tag = 'smem constant byte address 0x4 - core index']
  #allocation1 [shape = 'u32[144,128]{1,0:T(1,128)}', space=vmem, size = 0x12000, scoped, tag = 'internal scratch']
  #allocation2 [shape = 'f32[2,128]{1,0:T(2,128)}', space=vmem, size = 0x400, scoped, tag = 'scratch operand']
  %s0 = inlined_call_operand.hbm [shape: f32[2,4,2,128], index: 0, kind: input, shape index: {}]
  %s1 = inlined_call_operand.hbm [shape: f32[2,2,128], index: 1, kind: input, shape index: {}]
  %s2 = inlined_call_operand.hbm [shape: f32[2,1,128], index: 2, kind: output, shape index: {}]
  %s3 = sld [smem:[#allocation0]]
  $region57: #{tpu_custom_call.1} parent=0
    _
  %s5 = ssub.s32 1, %s3
  %s6 = scalar_select 0, %s5, %s3
  $region1: #{tpu_custom_call.1} parent=0
    #allocation3 [shape = 'u8[8192]{0}', space=vmem, size = 0x2000, scoped, tag = 'input window, operand 0']
    #allocation4 [shape = 's32[2]{0}', space=sflag, size = 0x8, scoped, tag = 'scoped memory for tpu_custom_call.1']
    #allocation5 [shape = 's32[2]{0}', space=sflag, size = 0x8, scoped, tag = 'scoped memory for tpu_custom_call.1']
    #allocation6 [shape = 'u8[2048]{0}', space=vmem, size = 0x800, scoped, tag = 'input window, operand 1']
    #allocation7 [shape = 's32[2]{0}', space=sflag, size = 0x8, scoped, tag = 'scoped memory for tpu_custom_call.1']
    #allocation8 [shape = 'u8[1024]{0}', space=vmem, size = 0x400, scoped, tag = 'output window, operand 0']
    %7 = vsyncpa [#allocation4], 0
    %s8 = scalar_lea.sflag [#allocation4], 1
    %9 = vsyncpa %s8, 0
    %10 = vsyncpa [#allocation7], 0
    %s11 = scalar_lea.sflag [#allocation7], 1
    %12 = vsyncpa %s11, 0
    %13 = vsyncpa [#allocation5], 0
    %s14 = scalar_lea.sflag [#allocation5], 1
    %15 = vsyncpa %s14, 0
    loop: start=0, step=1, limit=4
    $region2: #{tpu_custom_call.1} parent=1 // loop_pre_header
      _
    $region3: #{tpu_custom_call.1} parent=1 // loop_header
      %s17 = sphi 0, %s21
      %p18 = scmp.ge.s32.totalorder %s17, 4
      %s24 = sphi 0, %s36
      %s25 = sphi 0, %s32
      %s26 = sphi 0, %s24
      %s27 = sphi 0, %s25
      %s28 = sphi 0, %s26
      %s29 = sphi 0, %s27
      %s41 = sphi 0, %s43
      %s44 = sphi 0, %s41
      %s45 = sphi 0, %s44
      %s61 = sphi 0, %s45
      %s69 = sphi 0, %s71
      %s72 = sphi 0, %s69
      %s73 = sphi 0, %s72
      %s89 = sphi 0, %s73
      %s95 = sphi 0, %s97
      %s98 = sphi 0, %s95
      %s99 = sphi 0, %s98
      %s115 = sphi 0, %s99
    $region4: #{tpu_custom_call.1} parent=1 // loop_header_branch
      %20 = sbr.rel (%p18) target = $region8
    $region5: #{tpu_custom_call.1} parent=1 // loop_body
      %s22 = ssub.s32 %s17, 1
      %s23 = ssub.s32 %s17, 2
      %s30 = sadd.s32 1, %s25
      %p31 = scmp.ge.s32.totalorder %s30, 1
      %s32 = scalar_select %p31, 0, %s30
      %s33 = sadd.s32 1, %s24
      %s34 = scalar_select %p31, %s33, %s24
      %p35 = scmp.ge.s32.totalorder %s34, 2
      %s36 = scalar_select %p35, 0, %s34
      %s37 = ssub.s32 %s24, %s36
      %s38 = ssub.s32 %s25, %s32
      %s39 = sor.u32 %s37, %s38
      %p40 = scmp.eq.s32.totalorder %s39, 0
      %s42 = sadd.s32 %s41, 1
      %s43 = scalar_select %p40, %s41, %s42
      %p46 = pneg %p40
      %p47 = scmp.eq.s32.totalorder %s17, 1
      %p48 = por %p46, %p47
      %p49 = scmp.ne.s32.totalorder %s41, %s44
      %p50 = scmp.eq.s32.totalorder %s17, 0
      %p51 = por %p49, %p50
      %p52 = scmp.ne.s32.totalorder %s41, %s44
      %p53 = scmp.eq.s32.totalorder %s22, 1
      %p54 = por %p52, %p53
      %p55 = scmp.ne.s32.totalorder %s44, %s45
      %p56 = scmp.eq.s32.totalorder %s22, 0
      %p57 = por %p55, %p56
      %p58 = scmp.ne.s32.totalorder %s44, %s45
      %p59 = scmp.eq.s32.totalorder %s23, 1
      %p60 = por %p58, %p59
      %p62 = scmp.ne.s32.totalorder %s45, %s61
      %p63 = scmp.eq.s32.totalorder %s23, 0
      %p64 = por %p62, %p63
      %s65 = ssub.s32 %s24, %s36
      %s66 = ssub.s32 %s25, %s32
      %s67 = sor.u32 %s65, %s66
      %p68 = scmp.eq.s32.totalorder %s67, 0
      %s70 = sadd.s32 %s69, 1
      %s71 = scalar_select %p68, %s69, %s70
      %p74 = pneg %p68
      %p75 = scmp.eq.s32.totalorder %s17, 1
      %p76 = por %p74, %p75
      %p77 = scmp.ne.s32.totalorder %s69, %s72
      %p78 = scmp.eq.s32.totalorder %s17, 0
      %p79 = por %p77, %p78
      %p80 = scmp.ne.s32.totalorder %s69, %s72
      %p81 = scmp.eq.s32.totalorder %s22, 1
      %p82 = por %p80, %p81
      %p83 = scmp.ne.s32.totalorder %s72, %s73
      %p84 = scmp.eq.s32.totalorder %s22, 0
      %p85 = por %p83, %p84
      %p86 = scmp.ne.s32.totalorder %s72, %s73
      %p87 = scmp.eq.s32.totalorder %s23, 1
      %p88 = por %p86, %p87
      %p90 = scmp.ne.s32.totalorder %s73, %s89
      %p91 = scmp.eq.s32.totalorder %s23, 0
      %p92 = por %p90, %p91
      %s93 = ssub.s32 %s24, %s36
      %p94 = scmp.eq.s32.totalorder %s93, 0
      %s96 = sadd.s32 %s95, 1
      %s97 = scalar_select %p94, %s95, %s96
      %p100 = pneg %p94
      %p101 = scmp.eq.s32.totalorder %s17, 1
      %p102 = por %p100, %p101
      %p103 = scmp.ne.s32.totalorder %s95, %s98
      %p104 = scmp.eq.s32.totalorder %s17, 0
      %p105 = por %p103, %p104
      %p106 = scmp.ne.s32.totalorder %s95, %s98
      %p107 = scmp.eq.s32.totalorder %s22, 1
      %p108 = por %p106, %p107
      %p109 = scmp.ne.s32.totalorder %s98, %s99
      %p110 = scmp.eq.s32.totalorder %s22, 0
      %p111 = por %p109, %p110
      %p112 = scmp.ne.s32.totalorder %s98, %s99
      %p113 = scmp.eq.s32.totalorder %s23, 1
      %p114 = por %p112, %p113
      %p116 = scmp.ne.s32.totalorder %s99, %s115
      %p117 = scmp.eq.s32.totalorder %s23, 0
      %p118 = por %p116, %p117
      %p119 = scmp.le.s32.totalorder 1, %s17
      %p120 = scmp.lt.s32.totalorder %s17, 3
      %p121 = pnand %p119, %p120
      %p122 = pneg %p121
      // Predicated region
      $region9: #{tpu_custom_call.1} parent=5 // pred_check
        _
      $region10: #{tpu_custom_call.1} parent=5 // pred_check_branch
        %124 = sbr.rel (%p121) target = $region12
      $region11: #{tpu_custom_call.1} parent=5 // pred_region
        %s125 = ssub.s32 %s17, 1
      $region12: #{tpu_custom_call.1} parent=5 // pred_fallthru
        _
      %p126 = scmp.lt.s32.totalorder %s17, 2
      // Predicated region
      $region13: #{tpu_custom_call.1} parent=5 // pred_check
        %p127 = pneg %p126
      $region14: #{tpu_custom_call.1} parent=5 // pred_check_branch
        %129 = sbr.rel (%p127) target = $region16
      $region15: #{tpu_custom_call.1} parent=5 // pred_region
        // Predicated region
        $region17: #{tpu_custom_call.1} parent=15 // pred_check
          %p130 = pneg %p51
        $region18: #{tpu_custom_call.1} parent=15 // pred_check_branch
          %132 = sbr.rel (%p130) target = $region20
        $region19: #{tpu_custom_call.1} parent=15 // pred_region
          %s133 = sand.u32 %s41, 1
          %s134 = scalar_lea.sflag [#allocation4], %s133
          %s135 = sand.u32 %s41, 1
          %s136 = smul.addr %s135, 8
          %s137 = scalar_lea.vmem [#allocation3], %s136
          %s139 = ssub.s32 128, 128
          %140 = vsyncadd %s134, %s139
          %s141 = smul.addr %s24, 4
          %s142 = sadd.s32 %s25, %s141
          %s143 = smul.addr %s142, 32
          %s144 = scalar_lea.hbm %s0, %s143
          %s145 = sshll.u32 %s137, 4
          %s146 = int_to_ptr.vmem [resolvable:$true] %s145
          %151 = dma.hbm_to_vmem [thread:$0]  %s144, 128, %s146, %s134, 32, 32, 2
        $region20: #{tpu_custom_call.1} parent=15 // pred_fallthru
          _
        // Predicated region
        $region21: #{tpu_custom_call.1} parent=15 // pred_check
          %p152 = pneg %p79
        $region22: #{tpu_custom_call.1} parent=15 // pred_check_branch
          %154 = sbr.rel (%p152) target = $region24
        $region23: #{tpu_custom_call.1} parent=15 // pred_region
          %s155 = sand.u32 %s69, 1
          %s156 = scalar_lea.sflag [#allocation7], %s155
          %s157 = sand.u32 %s69, 1
          %s158 = smul.addr %s157, 2
          %s159 = scalar_lea.vmem [#allocation6], %s158
          %s161 = ssub.s32 32, 32
          %162 = vsyncadd %s156, %s161
          %s163 = sadd.s32 %s25, %s24
          %s164 = smul.addr %s163, 32
          %s165 = scalar_lea.hbm %s1, %s164
          %s167 = sshll.u32 %s159, 4
          %s168 = int_to_ptr.vmem [resolvable:$true] %s167
          %170 = dma.hbm_to_vmem [thread:$0]  %s165, 32, %s168, %s156
        $region24: #{tpu_custom_call.1} parent=15 // pred_fallthru
          _
      $region16: #{tpu_custom_call.1} parent=5 // pred_fallthru
        _
      %p171 = scmp.le.s32.totalorder 1, %s17
      %p172 = scmp.lt.s32.totalorder %s17, 3
      %p173 = pnand %p171, %p172
      %p174 = pneg %p173
      // Predicated region
      $region25: #{tpu_custom_call.1} parent=5 // pred_check
        _
      $region26: #{tpu_custom_call.1} parent=5 // pred_check_branch
        %176 = sbr.rel (%p173) target = $region28
      $region27: #{tpu_custom_call.1} parent=5 // pred_region
        %s177 = ssub.s32 %s17, 1
        %s178 = sand.u32 %s44, 1
        %s179 = scalar_lea.sflag [#allocation4], %s178
        %s180 = sand.u32 %s44, 1
        %s181 = smul.addr %s180, 8
        %s182 = scalar_lea.vmem [#allocation3], %s181
        // Predicated region
        $region29: #{tpu_custom_call.1} parent=27 // pred_check
          %p183 = pneg %p57
        $region30: #{tpu_custom_call.1} parent=27 // pred_check_branch
          %185 = sbr.rel (%p183) target = $region32
        $region31: #{tpu_custom_call.1} parent=27 // pred_region
          %186 = dma.done %s179, 128
        $region32: #{tpu_custom_call.1} parent=27 // pred_fallthru
          _
        %s187 = sand.u32 %s72, 1
        %s188 = scalar_lea.sflag [#allocation7], %s187
        %s189 = sand.u32 %s72, 1
        %s190 = smul.addr %s189, 2
        %s191 = scalar_lea.vmem [#allocation6], %s190
        // Predicated region
        $region33: #{tpu_custom_call.1} parent=27 // pred_check
          %p192 = pneg %p85
        $region34: #{tpu_custom_call.1} parent=27 // pred_check_branch
          %194 = sbr.rel (%p192) target = $region36
        $region35: #{tpu_custom_call.1} parent=27 // pred_region
          %195 = dma.done %s188, 32
        $region36: #{tpu_custom_call.1} parent=27 // pred_fallthru
          _
        %s196 = sand.u32 %s44, 1
        %s197 = scalar_lea.sflag [#allocation4], %s196
        %s198 = sand.u32 %s44, 1
        %s199 = smul.addr %s198, 8
        %s200 = scalar_lea.vmem [#allocation3], %s199
        %p201 = pneg %p57
        %p202 = pneg %p54
        %s203 = sand.u32 %s72, 1
        %s204 = scalar_lea.sflag [#allocation7], %s203
        %s205 = sand.u32 %s72, 1
        %s206 = smul.addr %s205, 2
        %s207 = scalar_lea.vmem [#allocation6], %s206
        %p208 = pneg %p85
        %p209 = pneg %p82
        %p210 = pneg %p111
        %p211 = pneg %p108
        %s212 = sand.u32 %s98, 1
        %s213 = scalar_lea.sflag [#allocation5], %s212
        %s214 = sand.u32 %s98, 1
        %s215 = scalar_lea.vmem [#allocation8], %s214
        %v216 = vld [vmem:[%s191] sm:$0x3]
        %v217 = vld [vmem:[%s182] sm:$0x3]
        %v218 = vld [vmem:[%s182 + $0x2] sm:$0x3]
        %v219 = vld [vmem:[%s182 + $0x4] sm:$0x3]
        %v220 = vld [vmem:[%s182 + $0x6] sm:$0x3]
        %v221 = vsub.f32 %v217, %v216
        %v222 = vand.u32 2147483647, %v221
        %v223 = vsub.f32 %v218, %v216
        %v224 = vand.u32 2147483647, %v223
        %v225 = vsub.f32 %v219, %v216
        %v226 = vand.u32 2147483647, %v225
        %v227 = vsub.f32 %v220, %v216
        %v228 = vand.u32 2147483647, %v227
        %v229 = vadd.f32 %v222, %v224
        %v230 = vadd.f32 %v226, %v228
        %v231 = vadd.f32 %v229, %v230
        %v232 = vmul.f32 %v231, 0.25
        %v233 = vsub.f32 %v217, %v218
        %v234 = vand.u32 2147483647, %v233
        %v235 = vsub.f32 %v217, %v219
        %v236 = vand.u32 2147483647, %v235
        %v237 = vsub.f32 %v217, %v220
        %v238 = vand.u32 2147483647, %v237
        %v239 = vsub.f32 %v218, %v219
        %v240 = vand.u32 2147483647, %v239
        %v241 = vsub.f32 %v218, %v220
        %v242 = vand.u32 2147483647, %v241
        %v243 = vsub.f32 %v219, %v220
        %v244 = vand.u32 2147483647, %v243
        %v245 = vadd.f32 %v234, %v236
        %v246 = vadd.f32 %v238, %v240
        %v247 = vadd.f32 %v242, %v244
        %v248 = vadd.f32 %v245, %v246
        %v249 = vadd.f32 %v248, %v247
        %v250 = vmul.f32 %v249, 0.0625
        %v251 = vsub.f32 %v232, %v250
        %p252 = scmp.eq.s32.totalorder %s27, 0
        // Predicated region
        $region37: #{tpu_custom_call.1} parent=27 // pred_check
          %p253 = pneg %p252
        $region38: #{tpu_custom_call.1} parent=27 // pred_check_branch
          %255 = sbr.rel (%p253) target = $region40
        $region39: #{tpu_custom_call.1} parent=27 // pred_region
          %256 = vst [vmem:[#allocation2] sm:$0x3] 0.0
        $region40: #{tpu_custom_call.1} parent=27 // pred_fallthru
          _
        %v257 = vld [vmem:[#allocation2] sm:$0x3]
        %v258 = vadd.f32 %v257, %v251
        %259 = vst [vmem:[#allocation2] sm:$0x3] %v258
        // Predicated region
        $region41: #{tpu_custom_call.1} parent=27 // pred_check
          %p260 = pneg %p252
        $region42: #{tpu_custom_call.1} parent=27 // pred_check_branch
          %262 = sbr.rel (%p260) target = $region44
        $region43: #{tpu_custom_call.1} parent=27 // pred_region
          %v263 = vld [vmem:[#allocation2] sm:$0x3]
          %vm264 = vcmask 1041408
          %v265 = vsel %vm264, %v263, 0.0
          %266 = vadd.xlane.f32.xlu0 %v265
          %v267 = vpop.xlane.xlu0 %266
          %v268 = vrot.slane %v267, 4
          %v269 = vadd.f32 %v267, %v268
          %v270 = vrot.slane %v269, 2
          %v271 = vadd.f32 %v269, %v270
          %v272 = vrot.slane %v271, 1
          %v273 = vadd.f32 %v271, %v272
          %s274 = vtos %v273
          %s275 = smul.f32 %s274, 0.00390625
          %v276 = vstv %s275
          %277 = vst [vmem:[%s215] sm:$0x1] %v276
        $region44: #{tpu_custom_call.1} parent=27 // pred_fallthru
          _
        %s278 = sand.u32 %s98, 1
        %s279 = scalar_lea.sflag [#allocation5], %s278
        %s280 = sand.u32 %s98, 1
        %s281 = scalar_lea.vmem [#allocation8], %s280
        // Predicated region
        $region45: #{tpu_custom_call.1} parent=27 // pred_check
          %p282 = pneg %p108
        $region46: #{tpu_custom_call.1} parent=27 // pred_check_branch
          %284 = sbr.rel (%p282) target = $region48
        $region47: #{tpu_custom_call.1} parent=27 // pred_region
          %s286 = ssub.s32 16, 16
          %287 = vsyncadd %s279, %s286
          %s288 = smul.addr %s26, 16
          %s289 = scalar_lea.hbm %s2, %s288
          %s291 = sshll.u32 %s281, 4
          %s292 = int_to_ptr.vmem [resolvable:$true] %s291
          %294 = dma.vmem_to_hbm [thread:$0]  %s292, 16, %s289, %s279
        $region48: #{tpu_custom_call.1} parent=27 // pred_fallthru
          _
      $region28: #{tpu_custom_call.1} parent=5 // pred_fallthru
        _
      %p295 = scmp.le.s32.totalorder 2, %s17
      // Predicated region
      $region49: #{tpu_custom_call.1} parent=5 // pred_check
        %p296 = pneg %p295
      $region50: #{tpu_custom_call.1} parent=5 // pred_check_branch
        %298 = sbr.rel (%p296) target = $region52
      $region51: #{tpu_custom_call.1} parent=5 // pred_region
        %s299 = ssub.s32 %s17, 2
        // Predicated region
        $region53: #{tpu_custom_call.1} parent=51 // pred_check
          %p300 = pneg %p114
        $region54: #{tpu_custom_call.1} parent=51 // pred_check_branch
          %302 = sbr.rel (%p300) target = $region56
        $region55: #{tpu_custom_call.1} parent=51 // pred_region
          %s303 = sand.u32 %s99, 1
          %s304 = scalar_lea.sflag [#allocation5], %s303
          %s305 = sand.u32 %s99, 1
          %s306 = scalar_lea.vmem [#allocation8], %s305
          %307 = dma.done %s304, 16
        $region56: #{tpu_custom_call.1} parent=51 // pred_fallthru
          _
      $region52: #{tpu_custom_call.1} parent=5 // pred_fallthru
        _
    $region6: #{tpu_custom_call.1} parent=1 // loop_footer
      %s21 = sadd.s32 1, %s17
    $region7: #{tpu_custom_call.1} parent=1 // loop_footer_branch
      %16 = sbr.rel target = $region3
    $region8: #{tpu_custom_call.1} parent=1 // loop_exit
      _
    %308 = vsyncpa [#allocation4], 1
    %s309 = scalar_lea.sflag [#allocation4], 1
    %310 = vsyncpa %s309, 1
    %311 = vsyncpa [#allocation7], 1
    %s312 = scalar_lea.sflag [#allocation7], 1
    %313 = vsyncpa %s312, 1
    %314 = vsyncpa [#allocation5], 1
    %s315 = scalar_lea.sflag [#allocation5], 1
    %316 = vsyncpa %s315, 1

</llo_original>
